<compile_context>
chip_gen: v5e
topology: v5e:2x2
jax: 0.10.0
libtpu: 0.0.40
codegen_flags: <defaults>
</compile_context>

<pallas_src>
import math

import jax
import jax.numpy as jnp
from jax import lax
from jax.experimental import pallas as pl
from jax.experimental.pallas import tpu as pltpu


# --------------------------------------------------------------------------
# Kernel 1: fused Q/K/V projection, head-major bf16 output
# --------------------------------------------------------------------------
def qkv_proj_kernel(xq_ref, xk_ref, xv_ref,
                    wq_ref, bq_ref, wk_ref, bk_ref, wv_ref, bv_ref,
                    q_out, k_out, v_out):
    # x*_ref : (1, TS, d_model)        input dtype
    # w*_ref : (d_model, hidden)       bf16 (wq/bq pre-scaled by 1/sqrt(depth))
    # b*_ref : (1, hidden)             f32
    # *_out  : (1, nh, TS, depth)      bf16, head-major
    def proj(x_ref, w_ref, b_ref, o_ref):
        nh = o_ref.shape[1]
        depth = o_ref.shape[3]
        y = jnp.dot(x_ref[0].astype(w_ref.dtype), w_ref[...],
                    preferred_element_type=jnp.float32) + b_ref[...]   # (TS, hidden)
        for h in range(nh):                       # static unroll, lane slices
            o_ref[0, h] = y[:, h * depth:(h + 1) * depth].astype(o_ref.dtype)

    proj(xq_ref, wq_ref, bq_ref, q_out)
    proj(xk_ref, wk_ref, bk_ref, k_out)
    proj(xv_ref, wv_ref, bv_ref, v_out)


# --------------------------------------------------------------------------
# Kernel 2: attention (exact softmax) + head-blocked output projection
# --------------------------------------------------------------------------
def mha_attn_kernel(q_ref, k_ref, v_ref, maskb_ref, wd_ref, bd_ref,
                    out_ref, attn_ref, acc_ref):
    # q_ref     : (1, HB, TQ, depth)   bf16 (scale already folded in)
    # k_ref     : (1, HB, S,  depth)   bf16
    # v_ref     : (1, HB, S,  depth)   bf16
    # maskb_ref : (1, 1, S)            f32  (already mask * -1e10)
    # wd_ref    : (hidden, d_model)    bf16 (resident: constant block index)
    # bd_ref    : (1, d_model)         f32
    # out_ref   : (1, TQ, d_model)     accumulated over head-blocks
    # attn_ref  : (1, HB, TQ, S)       f32 per-head attention weights
    # acc_ref   : (TQ, d_model)        f32 VMEM scratch
    hb = pl.program_id(2)
    n_hb = pl.num_programs(2)
    HB = q_ref.shape[1]
    depth = q_ref.shape[3]

    @pl.when(hb == 0)
    def _():
        acc_ref[...] = jnp.zeros_like(acc_ref)

    mask_bias = maskb_ref[0]                                   # (1, S) f32

    head_outs = []
    for h in range(HB):                                        # static unroll
        qh = q_ref[0, h]                                       # (TQ, depth) bf16
        kh = k_ref[0, h]                                       # (S,  depth) bf16
        vh = v_ref[0, h]                                       # (S,  depth) bf16
        logits = lax.dot_general(qh, kh, (((1,), (1,)), ((), ())),
                                 preferred_element_type=jnp.float32)   # (TQ, S)
        logits = logits + mask_bias
        m = jnp.max(logits, axis=-1, keepdims=True)
        e = jnp.exp(logits - m)
        denom = jnp.sum(e, axis=-1, keepdims=True)
        w = e / denom                           # exact softmax (weights are a module output)
        attn_ref[0, h] = w.astype(attn_ref.dtype)
        head_outs.append(jnp.dot(w.astype(vh.dtype), vh,
                                 preferred_element_type=jnp.float32))  # (TQ, depth)

    # One K-dense GEMM for this head-block's contribution to the dense projection:
    # (TQ, HB*depth) @ (HB*depth, d_model) fills the MXU contraction dim.
    ho = jnp.concatenate(head_outs, axis=-1).astype(wd_ref.dtype)      # (TQ, HB*depth)
    row0 = pl.multiple_of(hb * (HB * depth), HB * depth)
    wd_blk = wd_ref[pl.ds(row0, HB * depth), :]                        # (HB*depth, d_model)
    acc_ref[...] += jnp.dot(ho, wd_blk, preferred_element_type=jnp.float32)

    @pl.when(hb == n_hb - 1)
    def _():
        out_ref[0] = (acc_ref[...] + bd_ref[...]).astype(out_ref.dtype)


# --------------------------------------------------------------------------
# Tiling / budget helpers
# --------------------------------------------------------------------------
def _pick_tile(S, candidates):
    if S <= candidates[0]:
        return S
    for c in candidates:
        if S % c == 0:
            return c
    return S


def _pick_head_block(num_heads, depth, tq, s):
    # Target HB*depth ~ 256 lanes to fill the v6e/v7x MXU; cap so the
    # double-buffered f32 attention-weights block stays well inside VMEM.
    hb = max(1, min(num_heads, 256 // max(depth, 1)))
    while hb > 1 and 2 * hb * tq * s * 4 > 24 * 1024 * 1024:
        hb -= 1
    while num_heads % hb:
        hb -= 1
    return hb


def _vmem_limit_bytes():
    # Chip-aware VMEM budget: ~75% of physical (v5e/v6e: ~96 MiB, v7x: ~48 MiB).
    try:
        info = pltpu.get_tpu_info()
        cap = getattr(info, "vmem_capacity_bytes", None)
        if cap:
            return int(cap) * 3 // 4
    except Exception:
        pass
    return 64 * 1024 * 1024


# --------------------------------------------------------------------------
# Wrapper
# --------------------------------------------------------------------------
def multihead_attention(value, key, query, mask, params, *, num_heads,
                        compute_dtype=jnp.bfloat16):
    """Pallas implementation of MultiheadAttention.forward.

    value/key/query: (B, S, d_model); mask: (B, S) or None (added as mask*-1e10).
    params: (wq, bq, wk, bk, wv, bv, wd, bd) with weights pre-transposed
    [in_features, out_features]. Returns (output (B, S, d_model),
    attention_weights (B, num_heads, S, S)).
    """
    B, S, d_model = query.shape
    wq, bq, wk, bk, wv, bv, wd, bd = params
    hidden = wq.shape[1]
    assert hidden % num_heads == 0
    depth = hidden // num_heads
    scale = 1.0 / math.sqrt(depth)

    # Host-side constant folding / dtype prep (cheap, lane-layout preserving).
    wq_c = (wq * scale).astype(compute_dtype)
    wk_c = wk.astype(compute_dtype)
    wv_c = wv.astype(compute_dtype)
    wd_c = wd.astype(compute_dtype)
    bq_c = (bq * scale).reshape(1, hidden).astype(jnp.float32)
    bk_c = bk.reshape(1, hidden).astype(jnp.float32)
    bv_c = bv.reshape(1, hidden).astype(jnp.float32)
    bd_c = bd.reshape(1, d_model).astype(jnp.float32)
    if mask is None:
        mask_bias = jnp.zeros((B, 1, S), jnp.float32)
    else:
        mask_bias = (mask.astype(jnp.float32) * (-10000000000.0)).reshape(B, 1, S)

    vmem_limit = _vmem_limit_bytes()

    # ---- Kernel 1: QKV projection (lane-dense GEMMs, weights fetched once) ----
    TS = _pick_tile(S, (512, 256, 128))
    n_s = S // TS
    x_spec = pl.BlockSpec((1, TS, d_model), lambda b, s: (b, s, 0))
    w_spec = pl.BlockSpec((d_model, hidden), lambda b, s: (0, 0))
    b_spec = pl.BlockSpec((1, hidden), lambda b, s: (0, 0))
    h_spec = pl.BlockSpec((1, num_heads, TS, depth), lambda b, s: (b, 0, s, 0))
    head_shape = jax.ShapeDtypeStruct((B, num_heads, S, depth), compute_dtype)

    q_heads, k_heads, v_heads = pl.pallas_call(
        qkv_proj_kernel,
        out_shape=(head_shape, head_shape, head_shape),
        grid_spec=pltpu.PrefetchScalarGridSpec(
            num_scalar_prefetch=0,
            grid=(B, n_s),
            in_specs=[x_spec, x_spec, x_spec,
                      w_spec, b_spec, w_spec, b_spec, w_spec, b_spec],
            out_specs=(h_spec, h_spec, h_spec),
        ),
        compiler_params=pltpu.CompilerParams(
            dimension_semantics=("parallel", "parallel"),
            vmem_limit_bytes=vmem_limit),
    )(query, key, value, wq_c, bq_c, wk_c, bk_c, wv_c, bv_c)

    # ---- Kernel 2: attention + output projection ----
    TQ = _pick_tile(S, (256, 128))
    n_q = S // TQ
    HB = _pick_head_block(num_heads, depth, TQ, S)
    n_hb = num_heads // HB

    q_spec = pl.BlockSpec((1, HB, TQ, depth), lambda b, q, h: (b, h, q, 0))
    kv_spec = pl.BlockSpec((1, HB, S, depth), lambda b, q, h: (b, h, 0, 0))
    m_spec = pl.BlockSpec((1, 1, S), lambda b, q, h: (b, 0, 0))
    wd_spec = pl.BlockSpec((hidden, d_model), lambda b, q, h: (0, 0))
    bd_spec = pl.BlockSpec((1, d_model), lambda b, q, h: (0, 0))
    out_spec = pl.BlockSpec((1, TQ, d_model), lambda b, q, h: (b, q, 0))
    # TODO(synk): for very long S the (HB, TQ, S) f32 attention-weights block
    # should be S-tiled (flash-style); kept whole because the module returns
    # the full per-head weights.
    attn_spec = pl.BlockSpec((1, HB, TQ, S), lambda b, q, h: (b, h, q, 0))

    out, attn = pl.pallas_call(
        mha_attn_kernel,
        out_shape=(jax.ShapeDtypeStruct((B, S, d_model), query.dtype),
                   jax.ShapeDtypeStruct((B, num_heads, S, S), jnp.float32)),
        grid_spec=pltpu.PrefetchScalarGridSpec(
            num_scalar_prefetch=0,
            grid=(B, n_q, n_hb),
            in_specs=[q_spec, kv_spec, kv_spec, m_spec, wd_spec, bd_spec],
            out_specs=(out_spec, attn_spec),
            scratch_shapes=[pltpu.VMEM((TQ, d_model), jnp.float32)],
        ),
        compiler_params=pltpu.CompilerParams(
            dimension_semantics=("parallel", "parallel", "arbitrary"),
            vmem_limit_bytes=vmem_limit),
    )(q_heads, k_heads, v_heads, mask_bias, wd_c, bd_c)

    return out, attn


# --------------------------------------------------------------------------
# Pure-JAX reference mirroring the PyTorch module
# --------------------------------------------------------------------------
def reference_mha(value, key, query, mask, params, *, num_heads):
    wq, bq, wk, bk, wv, bv, wd, bd = params
    B, S, d_model = query.shape
    hidden = wq.shape[1]
    depth = hidden // num_heads

    def split_head(x):
        return x.reshape(B, -1, num_heads, depth).transpose(0, 2, 1, 3)

    q = split_head(query @ wq + bq)
    k = split_head(key @ wk + bk)
    v = split_head(value @ wv + bv)
    logits = jnp.einsum("bhqd,bhkd->bhqk", q, k) / math.sqrt(depth)
    if mask is not None:
        logits = logits + mask[:, None, None, :] * (-10000000000.0)
    attn = jax.nn.softmax(logits, axis=-1)
    out = jnp.einsum("bhqk,bhkd->bhqd", attn, v)
    out = out.transpose(0, 2, 1, 3).reshape(B, S, hidden)
    return out @ wd + bd, attn


if __name__ == "__main__":
    # small, deterministic setup
    B, S, d_model, num_heads = 2, 8, 32, 4
    hidden = d_model  # hidden_size defaults to d_model in the module

    key0 = jax.random.PRNGKey(0)
    ks = jax.random.split(key0, 12)

    query = jax.random.normal(ks[0], (B, S, d_model), jnp.float32)
    key_t = jax.random.normal(ks[1], (B, S, d_model), jnp.float32)
    value = jax.random.normal(ks[2], (B, S, d_model), jnp.float32)
    # mask: 1 where masked (added as mask * -1e10), 0 elsewhere
    mask = (jax.random.uniform(ks[3], (B, S)) < 0.25).astype(jnp.float32)

    def init_linear(kw, kb, fan_in, fan_out):
        bound = 1.0 / math.sqrt(fan_in)
        # weight stored pre-transposed: (in_features, out_features)
        w = jax.random.uniform(kw, (fan_in, fan_out), jnp.float32, -bound, bound)
        b = jax.random.uniform(kb, (1, fan_out), jnp.float32, -bound, bound)
        return w, b

    wq, bq = init_linear(ks[4], ks[5], d_model, hidden)
    wk, bk = init_linear(ks[6], ks[7], d_model, hidden)
    wv, bv = init_linear(ks[8], ks[9], d_model, hidden)
    wd, bd = init_linear(ks[10], ks[11], hidden, d_model)
    params = (wq, bq, wk, bk, wv, bv, wd, bd)

    out, attn = multihead_attention(value, key_t, query, mask, params,
                                    num_heads=num_heads)
    jax.block_until_ready((out, attn))

    ref_out, ref_attn = reference_mha(value, key_t, query, mask, params,
                                      num_heads=num_heads)
    assert out.shape == (B, S, d_model)
    assert attn.shape == (B, num_heads, S, S)
    # tolerance accounts for bf16 MXU inputs (f32 accumulation, exact softmax)
    assert jnp.allclose(out, ref_out, atol=2e-2, rtol=2e-2)
    assert jnp.allclose(attn, ref_attn, atol=2e-2, rtol=2e-2)

    print("KERNEL_OK")
</pallas_src>

<mosaic_0001>
module attributes {stable_mosaic.version = 11 : i64} {
  func.func @qkv_proj_kernel(%arg0: i32, %arg1: i32, %arg2: memref<1x8x32xf32, #tpu.memory_space<vmem>>, %arg3: memref<1x8x32xf32, #tpu.memory_space<vmem>>, %arg4: memref<1x8x32xf32, #tpu.memory_space<vmem>>, %arg5: memref<32x32xbf16, #tpu.memory_space<vmem>>, %arg6: memref<1x32xf32, #tpu.memory_space<vmem>>, %arg7: memref<32x32xbf16, #tpu.memory_space<vmem>>, %arg8: memref<1x32xf32, #tpu.memory_space<vmem>>, %arg9: memref<32x32xbf16, #tpu.memory_space<vmem>>, %arg10: memref<1x32xf32, #tpu.memory_space<vmem>>, %arg11: memref<1x4x8x8xbf16, #tpu.memory_space<vmem>>, %arg12: memref<1x4x8x8xbf16, #tpu.memory_space<vmem>>, %arg13: memref<1x4x8x8xbf16, #tpu.memory_space<vmem>>) attributes {dimension_semantics = [#tpu.dimension_semantics<parallel>, #tpu.dimension_semantics<parallel>], iteration_bounds = array<i64: 2, 1>, scalar_prefetch = 0 : i64, scratch_operands = 0 : i64, tpu.core_type = #tpu.core_type<tc>, window_params = [{transform_indices = @transform_0, window_bounds = array<i64: 1, 8, 32>}, {transform_indices = @transform_1, window_bounds = array<i64: 1, 8, 32>}, {transform_indices = @transform_2, window_bounds = array<i64: 1, 8, 32>}, {pipeline_mode = #tpu.pipeline_mode<synchronous>, transform_indices = @transform_3, window_bounds = array<i64: 32, 32>}, {pipeline_mode = #tpu.pipeline_mode<synchronous>, transform_indices = @transform_4, window_bounds = array<i64: 1, 32>}, {pipeline_mode = #tpu.pipeline_mode<synchronous>, transform_indices = @transform_5, window_bounds = array<i64: 32, 32>}, {pipeline_mode = #tpu.pipeline_mode<synchronous>, transform_indices = @transform_6, window_bounds = array<i64: 1, 32>}, {pipeline_mode = #tpu.pipeline_mode<synchronous>, transform_indices = @transform_7, window_bounds = array<i64: 32, 32>}, {pipeline_mode = #tpu.pipeline_mode<synchronous>, transform_indices = @transform_8, window_bounds = array<i64: 1, 32>}, {transform_indices = @transform_9, window_bounds = array<i64: 1, 4, 8, 8>}, {transform_indices = @transform_10, window_bounds = array<i64: 1, 4, 8, 8>}, {transform_indices = @transform_11, window_bounds = array<i64: 1, 4, 8, 8>}]} {
    %c0 = arith.constant 0 : index
    %c0_0 = arith.constant 0 : index
    %c0_1 = arith.constant 0 : index
    %0 = vector.load %arg2[%c0, %c0_0, %c0_1] : memref<1x8x32xf32, #tpu.memory_space<vmem>>, vector<1x8x32xf32>
    %1 = vector.shape_cast %0 : vector<1x8x32xf32> to vector<8x32xf32>
    %2 = arith.truncf %1 : vector<8x32xf32> to vector<8x32xbf16>
    %c0_2 = arith.constant 0 : index
    %c0_3 = arith.constant 0 : index
    %3 = vector.load %arg5[%c0_2, %c0_3] : memref<32x32xbf16, #tpu.memory_space<vmem>>, vector<32x32xbf16>
    %cst = arith.constant dense<0.000000e+00> : vector<8x32xf32>
    %4 = tpu.matmul %2, %3, %cst {dimension_numbers = #tpu.dot_dimension_numbers<[1], [0], [0], [1], [0, 0, 1, 1], [], []>} : vector<8x32xbf16>, vector<32x32xbf16>, vector<8x32xf32> -> vector<8x32xf32>
    %c0_4 = arith.constant 0 : index
    %c0_5 = arith.constant 0 : index
    %5 = vector.load %arg6[%c0_4, %c0_5] : memref<1x32xf32, #tpu.memory_space<vmem>>, vector<1x32xf32>
    %6 = vector.broadcast %5 : vector<1x32xf32> to vector<8x32xf32>
    %7 = arith.addf %4, %6 : vector<8x32xf32>
    %8 = vector.extract_strided_slice %7 {offsets = [0, 0], sizes = [8, 8], strides = [1, 1]} : vector<8x32xf32> to vector<8x8xf32>
    %9 = arith.truncf %8 : vector<8x8xf32> to vector<8x8xbf16>
    %c0_6 = arith.constant 0 : index
    %c0_7 = arith.constant 0 : index
    %c0_8 = arith.constant 0 : index
    %c0_9 = arith.constant 0 : index
    %10 = vector.load %arg11[%c0_6, %c0_7, %c0_8, %c0_9] : memref<1x4x8x8xbf16, #tpu.memory_space<vmem>>, vector<1x1x8x8xbf16>
    %11 = vector.shape_cast %10 : vector<1x1x8x8xbf16> to vector<8x8xbf16>
    %12 = vector.shape_cast %9 : vector<8x8xbf16> to vector<1x1x8x8xbf16>
    tpu.vector_store %arg11[%c0_6, %c0_7, %c0_8, %c0_9], %12 {strides = array<i32>} : memref<1x4x8x8xbf16, #tpu.memory_space<vmem>>, vector<1x1x8x8xbf16>,
    %13 = vector.extract_strided_slice %7 {offsets = [0, 8], sizes = [8, 8], strides = [1, 1]} : vector<8x32xf32> to vector<8x8xf32>
    %14 = arith.truncf %13 : vector<8x8xf32> to vector<8x8xbf16>
    %c0_10 = arith.constant 0 : index
    %c1 = arith.constant 1 : index
    %c0_11 = arith.constant 0 : index
    %c0_12 = arith.constant 0 : index
    %15 = vector.load %arg11[%c0_10, %c1, %c0_11, %c0_12] : memref<1x4x8x8xbf16, #tpu.memory_space<vmem>>, vector<1x1x8x8xbf16>
    %16 = vector.shape_cast %15 : vector<1x1x8x8xbf16> to vector<8x8xbf16>
    %17 = vector.shape_cast %14 : vector<8x8xbf16> to vector<1x1x8x8xbf16>
    tpu.vector_store %arg11[%c0_10, %c1, %c0_11, %c0_12], %17 {strides = array<i32>} : memref<1x4x8x8xbf16, #tpu.memory_space<vmem>>, vector<1x1x8x8xbf16>,
    %18 = vector.extract_strided_slice %7 {offsets = [0, 16], sizes = [8, 8], strides = [1, 1]} : vector<8x32xf32> to vector<8x8xf32>
    %19 = arith.truncf %18 : vector<8x8xf32> to vector<8x8xbf16>
    %c0_13 = arith.constant 0 : index
    %c2 = arith.constant 2 : index
    %c0_14 = arith.constant 0 : index
    %c0_15 = arith.constant 0 : index
    %20 = vector.load %arg11[%c0_13, %c2, %c0_14, %c0_15] : memref<1x4x8x8xbf16, #tpu.memory_space<vmem>>, vector<1x1x8x8xbf16>
    %21 = vector.shape_cast %20 : vector<1x1x8x8xbf16> to vector<8x8xbf16>
    %22 = vector.shape_cast %19 : vector<8x8xbf16> to vector<1x1x8x8xbf16>
    tpu.vector_store %arg11[%c0_13, %c2, %c0_14, %c0_15], %22 {strides = array<i32>} : memref<1x4x8x8xbf16, #tpu.memory_space<vmem>>, vector<1x1x8x8xbf16>,
    %23 = vector.extract_strided_slice %7 {offsets = [0, 24], sizes = [8, 8], strides = [1, 1]} : vector<8x32xf32> to vector<8x8xf32>
    %24 = arith.truncf %23 : vector<8x8xf32> to vector<8x8xbf16>
    %c0_16 = arith.constant 0 : index
    %c3 = arith.constant 3 : index
    %c0_17 = arith.constant 0 : index
    %c0_18 = arith.constant 0 : index
    %25 = vector.load %arg11[%c0_16, %c3, %c0_17, %c0_18] : memref<1x4x8x8xbf16, #tpu.memory_space<vmem>>, vector<1x1x8x8xbf16>
    %26 = vector.shape_cast %25 : vector<1x1x8x8xbf16> to vector<8x8xbf16>
    %27 = vector.shape_cast %24 : vector<8x8xbf16> to vector<1x1x8x8xbf16>
    tpu.vector_store %arg11[%c0_16, %c3, %c0_17, %c0_18], %27 {strides = array<i32>} : memref<1x4x8x8xbf16, #tpu.memory_space<vmem>>, vector<1x1x8x8xbf16>,
    %c0_19 = arith.constant 0 : index
    %c0_20 = arith.constant 0 : index
    %c0_21 = arith.constant 0 : index
    %28 = vector.load %arg3[%c0_19, %c0_20, %c0_21] : memref<1x8x32xf32, #tpu.memory_space<vmem>>, vector<1x8x32xf32>
    %29 = vector.shape_cast %28 : vector<1x8x32xf32> to vector<8x32xf32>
    %30 = arith.truncf %29 : vector<8x32xf32> to vector<8x32xbf16>
    %c0_22 = arith.constant 0 : index
    %c0_23 = arith.constant 0 : index
    %31 = vector.load %arg7[%c0_22, %c0_23] : memref<32x32xbf16, #tpu.memory_space<vmem>>, vector<32x32xbf16>
    %cst_24 = arith.constant dense<0.000000e+00> : vector<8x32xf32>
    %32 = tpu.matmul %30, %31, %cst_24 {dimension_numbers = #tpu.dot_dimension_numbers<[1], [0], [0], [1], [0, 0, 1, 1], [], []>} : vector<8x32xbf16>, vector<32x32xbf16>, vector<8x32xf32> -> vector<8x32xf32>
    %c0_25 = arith.constant 0 : index
    %c0_26 = arith.constant 0 : index
    %33 = vector.load %arg8[%c0_25, %c0_26] : memref<1x32xf32, #tpu.memory_space<vmem>>, vector<1x32xf32>
    %34 = vector.broadcast %33 : vector<1x32xf32> to vector<8x32xf32>
    %35 = arith.addf %32, %34 : vector<8x32xf32>
    %36 = vector.extract_strided_slice %35 {offsets = [0, 0], sizes = [8, 8], strides = [1, 1]} : vector<8x32xf32> to vector<8x8xf32>
    %37 = arith.truncf %36 : vector<8x8xf32> to vector<8x8xbf16>
    %c0_27 = arith.constant 0 : index
    %c0_28 = arith.constant 0 : index
    %c0_29 = arith.constant 0 : index
    %c0_30 = arith.constant 0 : index
    %38 = vector.load %arg12[%c0_27, %c0_28, %c0_29, %c0_30] : memref<1x4x8x8xbf16, #tpu.memory_space<vmem>>, vector<1x1x8x8xbf16>
    %39 = vector.shape_cast %38 : vector<1x1x8x8xbf16> to vector<8x8xbf16>
    %40 = vector.shape_cast %37 : vector<8x8xbf16> to vector<1x1x8x8xbf16>
    tpu.vector_store %arg12[%c0_27, %c0_28, %c0_29, %c0_30], %40 {strides = array<i32>} : memref<1x4x8x8xbf16, #tpu.memory_space<vmem>>, vector<1x1x8x8xbf16>,
    %41 = vector.extract_strided_slice %35 {offsets = [0, 8], sizes = [8, 8], strides = [1, 1]} : vector<8x32xf32> to vector<8x8xf32>
    %42 = arith.truncf %41 : vector<8x8xf32> to vector<8x8xbf16>
    %c0_31 = arith.constant 0 : index
    %c1_32 = arith.constant 1 : index
    %c0_33 = arith.constant 0 : index
    %c0_34 = arith.constant 0 : index
    %43 = vector.load %arg12[%c0_31, %c1_32, %c0_33, %c0_34] : memref<1x4x8x8xbf16, #tpu.memory_space<vmem>>, vector<1x1x8x8xbf16>
    %44 = vector.shape_cast %43 : vector<1x1x8x8xbf16> to vector<8x8xbf16>
    %45 = vector.shape_cast %42 : vector<8x8xbf16> to vector<1x1x8x8xbf16>
    tpu.vector_store %arg12[%c0_31, %c1_32, %c0_33, %c0_34], %45 {strides = array<i32>} : memref<1x4x8x8xbf16, #tpu.memory_space<vmem>>, vector<1x1x8x8xbf16>,
    %46 = vector.extract_strided_slice %35 {offsets = [0, 16], sizes = [8, 8], strides = [1, 1]} : vector<8x32xf32> to vector<8x8xf32>
    %47 = arith.truncf %46 : vector<8x8xf32> to vector<8x8xbf16>
    %c0_35 = arith.constant 0 : index
    %c2_36 = arith.constant 2 : index
    %c0_37 = arith.constant 0 : index
    %c0_38 = arith.constant 0 : index
    %48 = vector.load %arg12[%c0_35, %c2_36, %c0_37, %c0_38] : memref<1x4x8x8xbf16, #tpu.memory_space<vmem>>, vector<1x1x8x8xbf16>
    %49 = vector.shape_cast %48 : vector<1x1x8x8xbf16> to vector<8x8xbf16>
    %50 = vector.shape_cast %47 : vector<8x8xbf16> to vector<1x1x8x8xbf16>
    tpu.vector_store %arg12[%c0_35, %c2_36, %c0_37, %c0_38], %50 {strides = array<i32>} : memref<1x4x8x8xbf16, #tpu.memory_space<vmem>>, vector<1x1x8x8xbf16>,
    %51 = vector.extract_strided_slice %35 {offsets = [0, 24], sizes = [8, 8], strides = [1, 1]} : vector<8x32xf32> to vector<8x8xf32>
    %52 = arith.truncf %51 : vector<8x8xf32> to vector<8x8xbf16>
    %c0_39 = arith.constant 0 : index
    %c3_40 = arith.constant 3 : index
    %c0_41 = arith.constant 0 : index
    %c0_42 = arith.constant 0 : index
    %53 = vector.load %arg12[%c0_39, %c3_40, %c0_41, %c0_42] : memref<1x4x8x8xbf16, #tpu.memory_space<vmem>>, vector<1x1x8x8xbf16>
    %54 = vector.shape_cast %53 : vector<1x1x8x8xbf16> to vector<8x8xbf16>
    %55 = vector.shape_cast %52 : vector<8x8xbf16> to vector<1x1x8x8xbf16>
    tpu.vector_store %arg12[%c0_39, %c3_40, %c0_41, %c0_42], %55 {strides = array<i32>} : memref<1x4x8x8xbf16, #tpu.memory_space<vmem>>, vector<1x1x8x8xbf16>,
    %c0_43 = arith.constant 0 : index
    %c0_44 = arith.constant 0 : index
    %c0_45 = arith.constant 0 : index
    %56 = vector.load %arg4[%c0_43, %c0_44, %c0_45] : memref<1x8x32xf32, #tpu.memory_space<vmem>>, vector<1x8x32xf32>
    %57 = vector.shape_cast %56 : vector<1x8x32xf32> to vector<8x32xf32>
    %58 = arith.truncf %57 : vector<8x32xf32> to vector<8x32xbf16>
    %c0_46 = arith.constant 0 : index
    %c0_47 = arith.constant 0 : index
    %59 = vector.load %arg9[%c0_46, %c0_47] : memref<32x32xbf16, #tpu.memory_space<vmem>>, vector<32x32xbf16>
    %cst_48 = arith.constant dense<0.000000e+00> : vector<8x32xf32>
    %60 = tpu.matmul %58, %59, %cst_48 {dimension_numbers = #tpu.dot_dimension_numbers<[1], [0], [0], [1], [0, 0, 1, 1], [], []>} : vector<8x32xbf16>, vector<32x32xbf16>, vector<8x32xf32> -> vector<8x32xf32>
    %c0_49 = arith.constant 0 : index
    %c0_50 = arith.constant 0 : index
    %61 = vector.load %arg10[%c0_49, %c0_50] : memref<1x32xf32, #tpu.memory_space<vmem>>, vector<1x32xf32>
    %62 = vector.broadcast %61 : vector<1x32xf32> to vector<8x32xf32>
    %63 = arith.addf %60, %62 : vector<8x32xf32>
    %64 = vector.extract_strided_slice %63 {offsets = [0, 0], sizes = [8, 8], strides = [1, 1]} : vector<8x32xf32> to vector<8x8xf32>
    %65 = arith.truncf %64 : vector<8x8xf32> to vector<8x8xbf16>
    %c0_51 = arith.constant 0 : index
    %c0_52 = arith.constant 0 : index
    %c0_53 = arith.constant 0 : index
    %c0_54 = arith.constant 0 : index
    %66 = vector.load %arg13[%c0_51, %c0_52, %c0_53, %c0_54] : memref<1x4x8x8xbf16, #tpu.memory_space<vmem>>, vector<1x1x8x8xbf16>
    %67 = vector.shape_cast %66 : vector<1x1x8x8xbf16> to vector<8x8xbf16>
    %68 = vector.shape_cast %65 : vector<8x8xbf16> to vector<1x1x8x8xbf16>
    tpu.vector_store %arg13[%c0_51, %c0_52, %c0_53, %c0_54], %68 {strides = array<i32>} : memref<1x4x8x8xbf16, #tpu.memory_space<vmem>>, vector<1x1x8x8xbf16>,
    %69 = vector.extract_strided_slice %63 {offsets = [0, 8], sizes = [8, 8], strides = [1, 1]} : vector<8x32xf32> to vector<8x8xf32>
    %70 = arith.truncf %69 : vector<8x8xf32> to vector<8x8xbf16>
    %c0_55 = arith.constant 0 : index
    %c1_56 = arith.constant 1 : index
    %c0_57 = arith.constant 0 : index
    %c0_58 = arith.constant 0 : index
    %71 = vector.load %arg13[%c0_55, %c1_56, %c0_57, %c0_58] : memref<1x4x8x8xbf16, #tpu.memory_space<vmem>>, vector<1x1x8x8xbf16>
    %72 = vector.shape_cast %71 : vector<1x1x8x8xbf16> to vector<8x8xbf16>
    %73 = vector.shape_cast %70 : vector<8x8xbf16> to vector<1x1x8x8xbf16>
    tpu.vector_store %arg13[%c0_55, %c1_56, %c0_57, %c0_58], %73 {strides = array<i32>} : memref<1x4x8x8xbf16, #tpu.memory_space<vmem>>, vector<1x1x8x8xbf16>,
    %74 = vector.extract_strided_slice %63 {offsets = [0, 16], sizes = [8, 8], strides = [1, 1]} : vector<8x32xf32> to vector<8x8xf32>
    %75 = arith.truncf %74 : vector<8x8xf32> to vector<8x8xbf16>
    %c0_59 = arith.constant 0 : index
    %c2_60 = arith.constant 2 : index
    %c0_61 = arith.constant 0 : index
    %c0_62 = arith.constant 0 : index
    %76 = vector.load %arg13[%c0_59, %c2_60, %c0_61, %c0_62] : memref<1x4x8x8xbf16, #tpu.memory_space<vmem>>, vector<1x1x8x8xbf16>
    %77 = vector.shape_cast %76 : vector<1x1x8x8xbf16> to vector<8x8xbf16>
    %78 = vector.shape_cast %75 : vector<8x8xbf16> to vector<1x1x8x8xbf16>
    tpu.vector_store %arg13[%c0_59, %c2_60, %c0_61, %c0_62], %78 {strides = array<i32>} : memref<1x4x8x8xbf16, #tpu.memory_space<vmem>>, vector<1x1x8x8xbf16>,
    %79 = vector.extract_strided_slice %63 {offsets = [0, 24], sizes = [8, 8], strides = [1, 1]} : vector<8x32xf32> to vector<8x8xf32>
    %80 = arith.truncf %79 : vector<8x8xf32> to vector<8x8xbf16>
    %c0_63 = arith.constant 0 : index
    %c3_64 = arith.constant 3 : index
    %c0_65 = arith.constant 0 : index
    %c0_66 = arith.constant 0 : index
    %81 = vector.load %arg13[%c0_63, %c3_64, %c0_65, %c0_66] : memref<1x4x8x8xbf16, #tpu.memory_space<vmem>>, vector<1x1x8x8xbf16>
    %82 = vector.shape_cast %81 : vector<1x1x8x8xbf16> to vector<8x8xbf16>
    %83 = vector.shape_cast %80 : vector<8x8xbf16> to vector<1x1x8x8xbf16>
    tpu.vector_store %arg13[%c0_63, %c3_64, %c0_65, %c0_66], %83 {strides = array<i32>} : memref<1x4x8x8xbf16, #tpu.memory_space<vmem>>, vector<1x1x8x8xbf16>,
    return
  }
  func.func @transform_0(%arg0: i32, %arg1: i32) -> (i32, i32, i32) {
    %c0_i32 = arith.constant 0 : i32
    %c0_i32_0 = arith.constant 0 : i32
    return %arg0, %arg1, %c0_i32 : i32, i32, i32
  }
  func.func @transform_1(%arg0: i32, %arg1: i32) -> (i32, i32, i32) {
    %c0_i32 = arith.constant 0 : i32
    %c0_i32_0 = arith.constant 0 : i32
    return %arg0, %arg1, %c0_i32 : i32, i32, i32
  }
  func.func @transform_2(%arg0: i32, %arg1: i32) -> (i32, i32, i32) {
    %c0_i32 = arith.constant 0 : i32
    %c0_i32_0 = arith.constant 0 : i32
    return %arg0, %arg1, %c0_i32 : i32, i32, i32
  }
  func.func @transform_3(%arg0: i32, %arg1: i32) -> (i32, i32) {
    %c0_i32 = arith.constant 0 : i32
    %c0_i32_0 = arith.constant 0 : i32
    %c0_i32_1 = arith.constant 0 : i32
    return %c0_i32, %c0_i32_0 : i32, i32
  }
  func.func @transform_4(%arg0: i32, %arg1: i32) -> (i32, i32) {
    %c0_i32 = arith.constant 0 : i32
    %c0_i32_0 = arith.constant 0 : i32
    %c0_i32_1 = arith.constant 0 : i32
    return %c0_i32, %c0_i32_0 : i32, i32
  }
  func.func @transform_5(%arg0: i32, %arg1: i32) -> (i32, i32) {
    %c0_i32 = arith.constant 0 : i32
    %c0_i32_0 = arith.constant 0 : i32
    %c0_i32_1 = arith.constant 0 : i32
    return %c0_i32, %c0_i32_0 : i32, i32
  }
  func.func @transform_6(%arg0: i32, %arg1: i32) -> (i32, i32) {
    %c0_i32 = arith.constant 0 : i32
    %c0_i32_0 = arith.constant 0 : i32
    %c0_i32_1 = arith.constant 0 : i32
    return %c0_i32, %c0_i32_0 : i32, i32
  }
  func.func @transform_7(%arg0: i32, %arg1: i32) -> (i32, i32) {
    %c0_i32 = arith.constant 0 : i32
    %c0_i32_0 = arith.constant 0 : i32
    %c0_i32_1 = arith.constant 0 : i32
    return %c0_i32, %c0_i32_0 : i32, i32
  }
  func.func @transform_8(%arg0: i32, %arg1: i32) -> (i32, i32) {
    %c0_i32 = arith.constant 0 : i32
    %c0_i32_0 = arith.constant 0 : i32
    %c0_i32_1 = arith.constant 0 : i32
    return %c0_i32, %c0_i32_0 : i32, i32
  }
  func.func @transform_9(%arg0: i32, %arg1: i32) -> (i32, i32, i32, i32) {
    %c0_i32 = arith.constant 0 : i32
    %c0_i32_0 = arith.constant 0 : i32
    %c0_i32_1 = arith.constant 0 : i32
    return %arg0, %c0_i32, %arg1, %c0_i32_0 : i32, i32, i32, i32
  }
  func.func @transform_10(%arg0: i32, %arg1: i32) -> (i32, i32, i32, i32) {
    %c0_i32 = arith.constant 0 : i32
    %c0_i32_0 = arith.constant 0 : i32
    %c0_i32_1 = arith.constant 0 : i32
    return %arg0, %c0_i32, %arg1, %c0_i32_0 : i32, i32, i32, i32
  }
  func.func @transform_11(%arg0: i32, %arg1: i32) -> (i32, i32, i32, i32) {
    %c0_i32 = arith.constant 0 : i32
    %c0_i32_0 = arith.constant 0 : i32
    %c0_i32_1 = arith.constant 0 : i32
    return %arg0, %c0_i32, %arg1, %c0_i32_0 : i32, i32, i32, i32
  }
}

</mosaic_0001>

<llo_original>
// kernel: tpu_custom_call.1
$region0: #{tpu_custom_call.1}
  #allocation0 [shape = 'u32[]', space=smem, size = 0x4, offset = 0x4, fixed_abs, tag = 'smem constant byte address 0x4 - core index']
  #allocation1 [shape = 'u32[72,128]{1,0:T(1,128)}', space=vmem, size = 0x9000, scoped, tag = 'internal scratch']
  %s0 = inlined_call_operand.hbm [shape: f32[2,8,32], index: 0, kind: input, shape index: {}]
  %s1 = inlined_call_operand.hbm [shape: f32[2,8,32], index: 1, kind: input, shape index: {}]
  %s2 = inlined_call_operand.hbm [shape: f32[2,8,32], index: 2, kind: input, shape index: {}]
  %s3 = inlined_call_operand.hbm [shape: bf16[32,32], index: 3, kind: input, shape index: {}]
  %s4 = inlined_call_operand.vmem [shape: f32[1,32], index: 4, kind: input, shape index: {}]
  %s5 = inlined_call_operand.hbm [shape: bf16[32,32], index: 5, kind: input, shape index: {}]
  %s6 = inlined_call_operand.vmem [shape: f32[1,32], index: 6, kind: input, shape index: {}]
  %s7 = inlined_call_operand.hbm [shape: bf16[32,32], index: 7, kind: input, shape index: {}]
  %s8 = inlined_call_operand.vmem [shape: f32[1,32], index: 8, kind: input, shape index: {}]
  %s9 = inlined_call_operand.hbm [shape: bf16[2,4,8,8], index: 9, kind: output, shape index: {0}]
  %s10 = inlined_call_operand.hbm [shape: bf16[2,4,8,8], index: 10, kind: output, shape index: {1}]
  %s11 = inlined_call_operand.hbm [shape: bf16[2,4,8,8], index: 11, kind: output, shape index: {2}]
  %12 = xla_tuple %s9, %s10, %s11
  %s13 = sld [smem:[#allocation0]]
  $region109: #{tpu_custom_call.1} parent=0
    _
  %s15 = ssub.s32 1, %s13
  %s16 = scalar_select 0, %s15, %s13
  $region1: #{tpu_custom_call.1} parent=0
    #allocation2 [shape = 'u8[8192]{0}', space=vmem, size = 0x2000, scoped, tag = 'input window, operand 0']
    #allocation3 [shape = 's32[2]{0}', space=sflag, size = 0x8, scoped, tag = 'scoped memory for tpu_custom_call.1']
    #allocation4 [shape = 's32[2]{0}', space=sflag, size = 0x8, scoped, tag = 'scoped memory for tpu_custom_call.1']
    #allocation5 [shape = 'u8[8192]{0}', space=vmem, size = 0x2000, scoped, tag = 'input window, operand 1']
    #allocation6 [shape = 's32[2]{0}', space=sflag, size = 0x8, scoped, tag = 'scoped memory for tpu_custom_call.1']
    #allocation7 [shape = 'u8[8192]{0}', space=vmem, size = 0x2000, scoped, tag = 'input window, operand 2']
    #allocation8 [shape = 'u8[8192]{0}', space=vmem, size = 0x2000, scoped, tag = 'input window, operand 3, single buffered']
    #allocation9 [shape = 's32[1]{0}', space=sflag, size = 0x4, scoped, tag = 'scoped memory for tpu_custom_call.1']
    #allocation10 [shape = 'u8[8192]{0}', space=vmem, size = 0x2000, scoped, tag = 'input window, operand 5, single buffered']
    #allocation11 [shape = 'u8[8192]{0}', space=vmem, size = 0x2000, scoped, tag = 'input window, operand 7, single buffered']
    #allocation12 [shape = 's32[1]{0}', space=sflag, size = 0x4, scoped, tag = 'scoped memory for tpu_custom_call.1']
    #allocation13 [shape = 'u8[16384]{0}', space=vmem, size = 0x4000, scoped, tag = 'output window, operand 0']
    #allocation14 [shape = 'u8[16384]{0}', space=vmem, size = 0x4000, scoped, tag = 'output window, operand 1']
    #allocation15 [shape = 's32[2]{0}', space=sflag, size = 0x8, scoped, tag = 'scoped memory for tpu_custom_call.1']
    #allocation16 [shape = 'u8[16384]{0}', space=vmem, size = 0x4000, scoped, tag = 'output window, operand 2']
    %17 = vsyncpa [#allocation3], 0
    %s18 = scalar_lea.sflag [#allocation3], 1
    %19 = vsyncpa %s18, 0
    %20 = vsyncpa [#allocation6], 0
    %s21 = scalar_lea.sflag [#allocation6], 1
    %22 = vsyncpa %s21, 0
    %23 = vsyncpa [#allocation9], 0
    %24 = vsyncpa [#allocation12], 0
    %25 = vsyncpa [#allocation4], 0
    %s26 = scalar_lea.sflag [#allocation4], 1
    %27 = vsyncpa %s26, 0
    %28 = vsyncpa [#allocation15], 0
    %s29 = scalar_lea.sflag [#allocation15], 1
    %30 = vsyncpa %s29, 0
    loop: start=0, step=1, limit=4
    $region2: #{tpu_custom_call.1} parent=1 // loop_pre_header
      _
    $region3: #{tpu_custom_call.1} parent=1 // loop_header
      %s32 = sphi 0, %s36
      %p33 = scmp.ge.s32.totalorder %s32, 4
      %s39 = sphi 0, %s51
      %s40 = sphi 0, %s47
      %s41 = sphi 0, %s39
      %s42 = sphi 0, %s40
      %s43 = sphi 0, %s41
      %s44 = sphi 0, %s42
      %s56 = sphi 0, %s58
      %s59 = sphi 0, %s56
      %s60 = sphi 0, %s59
      %s76 = sphi 0, %s60
      %s84 = sphi 0, %s86
      %s87 = sphi 0, %s84
      %s88 = sphi 0, %s87
      %s104 = sphi 0, %s88
      %s112 = sphi 0, %s114
      %s115 = sphi 0, %s112
      %s116 = sphi 0, %s115
      %s132 = sphi 0, %s116
      %s136 = sphi 0, %s136
      %s138 = sphi 0, %s136
      %s139 = sphi 0, %s138
      %s153 = sphi 0, %s139
      %s157 = sphi 0, %s157
      %s159 = sphi 0, %s157
      %s160 = sphi 0, %s159
      %s174 = sphi 0, %s160
      %s178 = sphi 0, %s178
      %s180 = sphi 0, %s178
      %s181 = sphi 0, %s180
      %s195 = sphi 0, %s181
      %s199 = sphi 0, %s199
      %s201 = sphi 0, %s199
      %s202 = sphi 0, %s201
      %s216 = sphi 0, %s202
      %s220 = sphi 0, %s220
      %s222 = sphi 0, %s220
      %s223 = sphi 0, %s222
      %s237 = sphi 0, %s223
      %s241 = sphi 0, %s241
      %s243 = sphi 0, %s241
      %s244 = sphi 0, %s243
      %s258 = sphi 0, %s244
      %s266 = sphi 0, %s268
      %s269 = sphi 0, %s266
      %s270 = sphi 0, %s269
      %s286 = sphi 0, %s270
      %s294 = sphi 0, %s296
      %s297 = sphi 0, %s294
      %s298 = sphi 0, %s297
      %s314 = sphi 0, %s298
      %s322 = sphi 0, %s324
      %s325 = sphi 0, %s322
      %s326 = sphi 0, %s325
      %s342 = sphi 0, %s326
    $region4: #{tpu_custom_call.1} parent=1 // loop_header_branch
      %35 = sbr.rel (%p33) target = $region8
    $region5: #{tpu_custom_call.1} parent=1 // loop_body
      %s37 = ssub.s32 %s32, 1
      %s38 = ssub.s32 %s32, 2
      %s45 = sadd.s32 1, %s40
      %p46 = scmp.ge.s32.totalorder %s45, 1
      %s47 = scalar_select %p46, 0, %s45
      %s48 = sadd.s32 1, %s39
      %s49 = scalar_select %p46, %s48, %s39
      %p50 = scmp.ge.s32.totalorder %s49, 2
      %s51 = scalar_select %p50, 0, %s49
      %s52 = ssub.s32 %s39, %s51
      %s53 = ssub.s32 %s40, %s47
      %s54 = sor.u32 %s52, %s53
      %p55 = scmp.eq.s32.totalorder %s54, 0
      %s57 = sadd.s32 %s56, 1
      %s58 = scalar_select %p55, %s56, %s57
      %p61 = pneg %p55
      %p62 = scmp.eq.s32.totalorder %s32, 1
      %p63 = por %p61, %p62
      %p64 = scmp.ne.s32.totalorder %s56, %s59
      %p65 = scmp.eq.s32.totalorder %s32, 0
      %p66 = por %p64, %p65
      %p67 = scmp.ne.s32.totalorder %s56, %s59
      %p68 = scmp.eq.s32.totalorder %s37, 1
      %p69 = por %p67, %p68
      %p70 = scmp.ne.s32.totalorder %s59, %s60
      %p71 = scmp.eq.s32.totalorder %s37, 0
      %p72 = por %p70, %p71
      %p73 = scmp.ne.s32.totalorder %s59, %s60
      %p74 = scmp.eq.s32.totalorder %s38, 1
      %p75 = por %p73, %p74
      %p77 = scmp.ne.s32.totalorder %s60, %s76
      %p78 = scmp.eq.s32.totalorder %s38, 0
      %p79 = por %p77, %p78
      %s80 = ssub.s32 %s39, %s51
      %s81 = ssub.s32 %s40, %s47
      %s82 = sor.u32 %s80, %s81
      %p83 = scmp.eq.s32.totalorder %s82, 0
      %s85 = sadd.s32 %s84, 1
      %s86 = scalar_select %p83, %s84, %s85
      %p89 = pneg %p83
      %p90 = scmp.eq.s32.totalorder %s32, 1
      %p91 = por %p89, %p90
      %p92 = scmp.ne.s32.totalorder %s84, %s87
      %p93 = scmp.eq.s32.totalorder %s32, 0
      %p94 = por %p92, %p93
      %p95 = scmp.ne.s32.totalorder %s84, %s87
      %p96 = scmp.eq.s32.totalorder %s37, 1
      %p97 = por %p95, %p96
      %p98 = scmp.ne.s32.totalorder %s87, %s88
      %p99 = scmp.eq.s32.totalorder %s37, 0
      %p100 = por %p98, %p99
      %p101 = scmp.ne.s32.totalorder %s87, %s88
      %p102 = scmp.eq.s32.totalorder %s38, 1
      %p103 = por %p101, %p102
      %p105 = scmp.ne.s32.totalorder %s88, %s104
      %p106 = scmp.eq.s32.totalorder %s38, 0
      %p107 = por %p105, %p106
      %s108 = ssub.s32 %s39, %s51
      %s109 = ssub.s32 %s40, %s47
      %s110 = sor.u32 %s108, %s109
      %p111 = scmp.eq.s32.totalorder %s110, 0
      %s113 = sadd.s32 %s112, 1
      %s114 = scalar_select %p111, %s112, %s113
      %p117 = pneg %p111
      %p118 = scmp.eq.s32.totalorder %s32, 1
      %p119 = por %p117, %p118
      %p120 = scmp.ne.s32.totalorder %s112, %s115
      %p121 = scmp.eq.s32.totalorder %s32, 0
      %p122 = por %p120, %p121
      %p123 = scmp.ne.s32.totalorder %s112, %s115
      %p124 = scmp.eq.s32.totalorder %s37, 1
      %p125 = por %p123, %p124
      %p126 = scmp.ne.s32.totalorder %s115, %s116
      %p127 = scmp.eq.s32.totalorder %s37, 0
      %p128 = por %p126, %p127
      %p129 = scmp.ne.s32.totalorder %s115, %s116
      %p130 = scmp.eq.s32.totalorder %s38, 1
      %p131 = por %p129, %p130
      %p133 = scmp.ne.s32.totalorder %s116, %s132
      %p134 = scmp.eq.s32.totalorder %s38, 0
      %p135 = por %p133, %p134
      %s137 = sadd.s32 %s136, 1
      %p140 = scmp.eq.s32.totalorder %s32, 1
      %p141 = scmp.ne.s32.totalorder %s136, %s138
      %p142 = scmp.eq.s32.totalorder %s32, 0
      %p143 = por %p141, %p142
      %p144 = scmp.ne.s32.totalorder %s136, %s138
      %p145 = scmp.eq.s32.totalorder %s37, 1
      %p146 = por %p144, %p145
      %p147 = scmp.ne.s32.totalorder %s138, %s139
      %p148 = scmp.eq.s32.totalorder %s37, 0
      %p149 = por %p147, %p148
      %p150 = scmp.ne.s32.totalorder %s138, %s139
      %p151 = scmp.eq.s32.totalorder %s38, 1
      %p152 = por %p150, %p151
      %p154 = scmp.ne.s32.totalorder %s139, %s153
      %p155 = scmp.eq.s32.totalorder %s38, 0
      %p156 = por %p154, %p155
      %s158 = sadd.s32 %s157, 1
      %p161 = scmp.eq.s32.totalorder %s32, 1
      %p162 = scmp.ne.s32.totalorder %s157, %s159
      %p163 = scmp.eq.s32.totalorder %s32, 0
      %p164 = por %p162, %p163
      %p165 = scmp.ne.s32.totalorder %s157, %s159
      %p166 = scmp.eq.s32.totalorder %s37, 1
      %p167 = por %p165, %p166
      %p168 = scmp.ne.s32.totalorder %s159, %s160
      %p169 = scmp.eq.s32.totalorder %s37, 0
      %p170 = por %p168, %p169
      %p171 = scmp.ne.s32.totalorder %s159, %s160
      %p172 = scmp.eq.s32.totalorder %s38, 1
      %p173 = por %p171, %p172
      %p175 = scmp.ne.s32.totalorder %s160, %s174
      %p176 = scmp.eq.s32.totalorder %s38, 0
      %p177 = por %p175, %p176
      %s179 = sadd.s32 %s178, 1
      %p182 = scmp.eq.s32.totalorder %s32, 1
      %p183 = scmp.ne.s32.totalorder %s178, %s180
      %p184 = scmp.eq.s32.totalorder %s32, 0
      %p185 = por %p183, %p184
      %p186 = scmp.ne.s32.totalorder %s178, %s180
      %p187 = scmp.eq.s32.totalorder %s37, 1
      %p188 = por %p186, %p187
      %p189 = scmp.ne.s32.totalorder %s180, %s181
      %p190 = scmp.eq.s32.totalorder %s37, 0
      %p191 = por %p189, %p190
      %p192 = scmp.ne.s32.totalorder %s180, %s181
      %p193 = scmp.eq.s32.totalorder %s38, 1
      %p194 = por %p192, %p193
      %p196 = scmp.ne.s32.totalorder %s181, %s195
      %p197 = scmp.eq.s32.totalorder %s38, 0
      %p198 = por %p196, %p197
      %s200 = sadd.s32 %s199, 1
      %p203 = scmp.eq.s32.totalorder %s32, 1
      %p204 = scmp.ne.s32.totalorder %s199, %s201
      %p205 = scmp.eq.s32.totalorder %s32, 0
      %p206 = por %p204, %p205
      %p207 = scmp.ne.s32.totalorder %s199, %s201
      %p208 = scmp.eq.s32.totalorder %s37, 1
      %p209 = por %p207, %p208
      %p210 = scmp.ne.s32.totalorder %s201, %s202
      %p211 = scmp.eq.s32.totalorder %s37, 0
      %p212 = por %p210, %p211
      %p213 = scmp.ne.s32.totalorder %s201, %s202
      %p214 = scmp.eq.s32.totalorder %s38, 1
      %p215 = por %p213, %p214
      %p217 = scmp.ne.s32.totalorder %s202, %s216
      %p218 = scmp.eq.s32.totalorder %s38, 0
      %p219 = por %p217, %p218
      %s221 = sadd.s32 %s220, 1
      %p224 = scmp.eq.s32.totalorder %s32, 1
      %p225 = scmp.ne.s32.totalorder %s220, %s222
      %p226 = scmp.eq.s32.totalorder %s32, 0
      %p227 = por %p225, %p226
      %p228 = scmp.ne.s32.totalorder %s220, %s222
      %p229 = scmp.eq.s32.totalorder %s37, 1
      %p230 = por %p228, %p229
      %p231 = scmp.ne.s32.totalorder %s222, %s223
      %p232 = scmp.eq.s32.totalorder %s37, 0
      %p233 = por %p231, %p232
      %p234 = scmp.ne.s32.totalorder %s222, %s223
      %p235 = scmp.eq.s32.totalorder %s38, 1
      %p236 = por %p234, %p235
      %p238 = scmp.ne.s32.totalorder %s223, %s237
      %p239 = scmp.eq.s32.totalorder %s38, 0
      %p240 = por %p238, %p239
      %s242 = sadd.s32 %s241, 1
      %p245 = scmp.eq.s32.totalorder %s32, 1
      %p246 = scmp.ne.s32.totalorder %s241, %s243
      %p247 = scmp.eq.s32.totalorder %s32, 0
      %p248 = por %p246, %p247
      %p249 = scmp.ne.s32.totalorder %s241, %s243
      %p250 = scmp.eq.s32.totalorder %s37, 1
      %p251 = por %p249, %p250
      %p252 = scmp.ne.s32.totalorder %s243, %s244
      %p253 = scmp.eq.s32.totalorder %s37, 0
      %p254 = por %p252, %p253
      %p255 = scmp.ne.s32.totalorder %s243, %s244
      %p256 = scmp.eq.s32.totalorder %s38, 1
      %p257 = por %p255, %p256
      %p259 = scmp.ne.s32.totalorder %s244, %s258
      %p260 = scmp.eq.s32.totalorder %s38, 0
      %p261 = por %p259, %p260
      %s262 = ssub.s32 %s39, %s51
      %s263 = ssub.s32 %s40, %s47
      %s264 = sor.u32 %s262, %s263
      %p265 = scmp.eq.s32.totalorder %s264, 0
      %s267 = sadd.s32 %s266, 1
      %s268 = scalar_select %p265, %s266, %s267
      %p271 = pneg %p265
      %p272 = scmp.eq.s32.totalorder %s32, 1
      %p273 = por %p271, %p272
      %p274 = scmp.ne.s32.totalorder %s266, %s269
      %p275 = scmp.eq.s32.totalorder %s32, 0
      %p276 = por %p274, %p275
      %p277 = scmp.ne.s32.totalorder %s266, %s269
      %p278 = scmp.eq.s32.totalorder %s37, 1
      %p279 = por %p277, %p278
      %p280 = scmp.ne.s32.totalorder %s269, %s270
      %p281 = scmp.eq.s32.totalorder %s37, 0
      %p282 = por %p280, %p281
      %p283 = scmp.ne.s32.totalorder %s269, %s270
      %p284 = scmp.eq.s32.totalorder %s38, 1
      %p285 = por %p283, %p284
      %p287 = scmp.ne.s32.totalorder %s270, %s286
      %p288 = scmp.eq.s32.totalorder %s38, 0
      %p289 = por %p287, %p288
      %s290 = ssub.s32 %s39, %s51
      %s291 = ssub.s32 %s40, %s47
      %s292 = sor.u32 %s290, %s291
      %p293 = scmp.eq.s32.totalorder %s292, 0
      %s295 = sadd.s32 %s294, 1
      %s296 = scalar_select %p293, %s294, %s295
      %p299 = pneg %p293
      %p300 = scmp.eq.s32.totalorder %s32, 1
      %p301 = por %p299, %p300
      %p302 = scmp.ne.s32.totalorder %s294, %s297
      %p303 = scmp.eq.s32.totalorder %s32, 0
      %p304 = por %p302, %p303
      %p305 = scmp.ne.s32.totalorder %s294, %s297
      %p306 = scmp.eq.s32.totalorder %s37, 1
      %p307 = por %p305, %p306
      %p308 = scmp.ne.s32.totalorder %s297, %s298
      %p309 = scmp.eq.s32.totalorder %s37, 0
      %p310 = por %p308, %p309
      %p311 = scmp.ne.s32.totalorder %s297, %s298
      %p312 = scmp.eq.s32.totalorder %s38, 1
      %p313 = por %p311, %p312
      %p315 = scmp.ne.s32.totalorder %s298, %s314
      %p316 = scmp.eq.s32.totalorder %s38, 0
      %p317 = por %p315, %p316
      %s318 = ssub.s32 %s39, %s51
      %s319 = ssub.s32 %s40, %s47
      %s320 = sor.u32 %s318, %s319
      %p321 = scmp.eq.s32.totalorder %s320, 0
      %s323 = sadd.s32 %s322, 1
      %s324 = scalar_select %p321, %s322, %s323
      %p327 = pneg %p321
      %p328 = scmp.eq.s32.totalorder %s32, 1
      %p329 = por %p327, %p328
      %p330 = scmp.ne.s32.totalorder %s322, %s325
      %p331 = scmp.eq.s32.totalorder %s32, 0
      %p332 = por %p330, %p331
      %p333 = scmp.ne.s32.totalorder %s322, %s325
      %p334 = scmp.eq.s32.totalorder %s37, 1
      %p335 = por %p333, %p334
      %p336 = scmp.ne.s32.totalorder %s325, %s326
      %p337 = scmp.eq.s32.totalorder %s37, 0
      %p338 = por %p336, %p337
      %p339 = scmp.ne.s32.totalorder %s325, %s326
      %p340 = scmp.eq.s32.totalorder %s38, 1
      %p341 = por %p339, %p340
      %p343 = scmp.ne.s32.totalorder %s326, %s342
      %p344 = scmp.eq.s32.totalorder %s38, 0
      %p345 = por %p343, %p344
      %p346 = scmp.le.s32.totalorder 1, %s32
      %p347 = scmp.lt.s32.totalorder %s32, 3
      %p348 = pnand %p346, %p347
      %p349 = pneg %p348
      // Predicated region
      $region9: #{tpu_custom_call.1} parent=5 // pred_check
        _
      $region10: #{tpu_custom_call.1} parent=5 // pred_check_branch
        %351 = sbr.rel (%p348) target = $region12
      $region11: #{tpu_custom_call.1} parent=5 // pred_region
        %s352 = ssub.s32 %s32, 1
        // Predicated region
        $region13: #{tpu_custom_call.1} parent=11 // pred_check
          %p353 = pneg %p149
        $region14: #{tpu_custom_call.1} parent=11 // pred_check_branch
          %355 = sbr.rel (%p353) target = $region16
        $region15: #{tpu_custom_call.1} parent=11 // pred_region
          %357 = vsyncadd [#allocation9], 0
          %s358 = sshll.u32 %s3, 4
          %s359 = int_to_ptr.hbm [resolvable:$true] %s358
          %s360 = sshll.u32 [#allocation8], 4
          %s361 = int_to_ptr.vmem [resolvable:$true] %s360
          %366 = dma.hbm_to_vmem [thread:$0]  %s359, 256, %s361, [#allocation9], 64, 64, 4
        $region16: #{tpu_custom_call.1} parent=11 // pred_fallthru
          _
        // Predicated region
        $region17: #{tpu_custom_call.1} parent=11 // pred_check
          %p367 = pneg %p170
        $region18: #{tpu_custom_call.1} parent=11 // pred_check_branch
          %369 = sbr.rel (%p367) target = $region20
        $region19: #{tpu_custom_call.1} parent=11 // pred_region
          _
        $region20: #{tpu_custom_call.1} parent=11 // pred_fallthru
          _
        // Predicated region
        $region21: #{tpu_custom_call.1} parent=11 // pred_check
          %p370 = pneg %p191
        $region22: #{tpu_custom_call.1} parent=11 // pred_check_branch
          %372 = sbr.rel (%p370) target = $region24
        $region23: #{tpu_custom_call.1} parent=11 // pred_region
          %374 = vsyncadd [#allocation9], 0
          %s375 = sshll.u32 %s5, 4
          %s376 = int_to_ptr.hbm [resolvable:$true] %s375
          %s377 = sshll.u32 [#allocation10], 4
          %s378 = int_to_ptr.vmem [resolvable:$true] %s377
          %383 = dma.hbm_to_vmem [thread:$0]  %s376, 256, %s378, [#allocation9], 64, 64, 4
        $region24: #{tpu_custom_call.1} parent=11 // pred_fallthru
          _
        // Predicated region
        $region25: #{tpu_custom_call.1} parent=11 // pred_check
          %p384 = pneg %p212
        $region26: #{tpu_custom_call.1} parent=11 // pred_check_branch
          %386 = sbr.rel (%p384) target = $region28
        $region27: #{tpu_custom_call.1} parent=11 // pred_region
          _
        $region28: #{tpu_custom_call.1} parent=11 // pred_fallthru
          _
        // Predicated region
        $region29: #{tpu_custom_call.1} parent=11 // pred_check
          %p387 = pneg %p233
        $region30: #{tpu_custom_call.1} parent=11 // pred_check_branch
          %389 = sbr.rel (%p387) target = $region32
        $region31: #{tpu_custom_call.1} parent=11 // pred_region
          %391 = vsyncadd [#allocation12], 0
          %s392 = sshll.u32 %s7, 4
          %s393 = int_to_ptr.hbm [resolvable:$true] %s392
          %s394 = sshll.u32 [#allocation11], 4
          %s395 = int_to_ptr.vmem [resolvable:$true] %s394
          %400 = dma.hbm_to_vmem [thread:$0]  %s393, 256, %s395, [#allocation12], 64, 64, 4
        $region32: #{tpu_custom_call.1} parent=11 // pred_fallthru
          _
        // Predicated region
        $region33: #{tpu_custom_call.1} parent=11 // pred_check
          %p401 = pneg %p254
        $region34: #{tpu_custom_call.1} parent=11 // pred_check_branch
          %403 = sbr.rel (%p401) target = $region36
        $region35: #{tpu_custom_call.1} parent=11 // pred_region
          _
        $region36: #{tpu_custom_call.1} parent=11 // pred_fallthru
          _
      $region12: #{tpu_custom_call.1} parent=5 // pred_fallthru
        _
      %p404 = scmp.lt.s32.totalorder %s32, 2
      // Predicated region
      $region37: #{tpu_custom_call.1} parent=5 // pred_check
        %p405 = pneg %p404
      $region38: #{tpu_custom_call.1} parent=5 // pred_check_branch
        %407 = sbr.rel (%p405) target = $region40
      $region39: #{tpu_custom_call.1} parent=5 // pred_region
        // Predicated region
        $region41: #{tpu_custom_call.1} parent=39 // pred_check
          %p408 = pneg %p66
        $region42: #{tpu_custom_call.1} parent=39 // pred_check_branch
          %410 = sbr.rel (%p408) target = $region44
        $region43: #{tpu_custom_call.1} parent=39 // pred_region
          %s411 = sand.u32 %s56, 1
          %s412 = scalar_lea.sflag [#allocation3], %s411
          %s413 = sand.u32 %s56, 1
          %s414 = smul.addr %s413, 8
          %s415 = scalar_lea.vmem [#allocation2], %s414
          %417 = vsyncadd %s412, 0
          %s418 = sadd.s32 %s40, %s39
          %s419 = smul.addr %s418, 8
          %s420 = scalar_lea.hbm %s0, %s419
          %s422 = sshll.u32 %s420, 4
          %s423 = int_to_ptr.hbm [resolvable:$true] %s422
          %s424 = sshll.u32 %s415, 4
          %s425 = int_to_ptr.vmem [resolvable:$true] %s424
          %427 = dma.hbm_to_vmem [thread:$0]  %s423, 128, %s425, %s412
        $region44: #{tpu_custom_call.1} parent=39 // pred_fallthru
          _
        // Predicated region
        $region45: #{tpu_custom_call.1} parent=39 // pred_check
          %p428 = pneg %p94
        $region46: #{tpu_custom_call.1} parent=39 // pred_check_branch
          %430 = sbr.rel (%p428) target = $region48
        $region47: #{tpu_custom_call.1} parent=39 // pred_region
          %s431 = sand.u32 %s32, 1
          %s432 = scalar_lea.sflag [#allocation6], %s431
          %s433 = sand.u32 %s84, 1
          %s434 = smul.addr %s433, 8
          %s435 = scalar_lea.vmem [#allocation5], %s434
          %437 = vsyncadd %s432, 0
          %s438 = sadd.s32 %s40, %s39
          %s439 = smul.addr %s438, 8
          %s440 = scalar_lea.hbm %s1, %s439
          %s442 = sshll.u32 %s440, 4
          %s443 = int_to_ptr.hbm [resolvable:$true] %s442
          %s444 = sshll.u32 %s435, 4
          %s445 = int_to_ptr.vmem [resolvable:$true] %s444
          %447 = dma.hbm_to_vmem [thread:$0]  %s443, 128, %s445, %s432
        $region48: #{tpu_custom_call.1} parent=39 // pred_fallthru
          _
        // Predicated region
        $region49: #{tpu_custom_call.1} parent=39 // pred_check
          %p448 = pneg %p122
        $region50: #{tpu_custom_call.1} parent=39 // pred_check_branch
          %450 = sbr.rel (%p448) target = $region52
        $region51: #{tpu_custom_call.1} parent=39 // pred_region
          %s451 = sand.u32 %s32, 1
          %s452 = scalar_lea.sflag [#allocation6], %s451
          %s453 = sand.u32 %s112, 1
          %s454 = smul.addr %s453, 8
          %s455 = scalar_lea.vmem [#allocation7], %s454
          %457 = vsyncadd %s452, 0
          %s458 = sadd.s32 %s40, %s39
          %s459 = smul.addr %s458, 8
          %s460 = scalar_lea.hbm %s2, %s459
          %s462 = sshll.u32 %s460, 4
          %s463 = int_to_ptr.hbm [resolvable:$true] %s462
          %s464 = sshll.u32 %s455, 4
          %s465 = int_to_ptr.vmem [resolvable:$true] %s464
          %467 = dma.hbm_to_vmem [thread:$0]  %s463, 128, %s465, %s452
        $region52: #{tpu_custom_call.1} parent=39 // pred_fallthru
          _
      $region40: #{tpu_custom_call.1} parent=5 // pred_fallthru
        _
      %p468 = scmp.le.s32.totalorder 1, %s32
      %p469 = scmp.lt.s32.totalorder %s32, 3
      %p470 = pnand %p468, %p469
      %p471 = pneg %p470
      // Predicated region
      $region53: #{tpu_custom_call.1} parent=5 // pred_check
        _
      $region54: #{tpu_custom_call.1} parent=5 // pred_check_branch
        %473 = sbr.rel (%p470) target = $region56
      $region55: #{tpu_custom_call.1} parent=5 // pred_region
        %s474 = ssub.s32 %s32, 1
        %s475 = sand.u32 %s59, 1
        %s476 = scalar_lea.sflag [#allocation3], %s475
        %s477 = sand.u32 %s59, 1
        %s478 = smul.addr %s477, 8
        %s479 = scalar_lea.vmem [#allocation2], %s478
        // Predicated region
        $region57: #{tpu_custom_call.1} parent=55 // pred_check
          %p480 = pneg %p72
        $region58: #{tpu_custom_call.1} parent=55 // pred_check_branch
          %482 = sbr.rel (%p480) target = $region60
        $region59: #{tpu_custom_call.1} parent=55 // pred_region
          %484 = dma.done %s476, 128
        $region60: #{tpu_custom_call.1} parent=55 // pred_fallthru
          _
        %s485 = sand.u32 %s37, 1
        %s486 = scalar_lea.sflag [#allocation6], %s485
        %s487 = sand.u32 %s87, 1
        %s488 = smul.addr %s487, 8
        %s489 = scalar_lea.vmem [#allocation5], %s488
        // Predicated region
        $region61: #{tpu_custom_call.1} parent=55 // pred_check
          %p490 = pneg %p100
        $region62: #{tpu_custom_call.1} parent=55 // pred_check_branch
          %492 = sbr.rel (%p490) target = $region64
        $region63: #{tpu_custom_call.1} parent=55 // pred_region
          %494 = dma.done %s486, 128
        $region64: #{tpu_custom_call.1} parent=55 // pred_fallthru
          _
        %s495 = sand.u32 %s37, 1
        %s496 = scalar_lea.sflag [#allocation6], %s495
        %s497 = sand.u32 %s115, 1
        %s498 = smul.addr %s497, 8
        %s499 = scalar_lea.vmem [#allocation7], %s498
        // Predicated region
        $region65: #{tpu_custom_call.1} parent=55 // pred_check
          %p500 = pneg %p128
        $region66: #{tpu_custom_call.1} parent=55 // pred_check_branch
          %502 = sbr.rel (%p500) target = $region68
        $region67: #{tpu_custom_call.1} parent=55 // pred_region
          %504 = dma.done %s496, 128
        $region68: #{tpu_custom_call.1} parent=55 // pred_fallthru
          _
        // Predicated region
        $region69: #{tpu_custom_call.1} parent=55 // pred_check
          %p505 = pneg %p149
        $region70: #{tpu_custom_call.1} parent=55 // pred_check_branch
          %507 = sbr.rel (%p505) target = $region72
        $region71: #{tpu_custom_call.1} parent=55 // pred_region
          %509 = dma.done [#allocation9], 256
        $region72: #{tpu_custom_call.1} parent=55 // pred_fallthru
          _
        // Predicated region
        $region73: #{tpu_custom_call.1} parent=55 // pred_check
          %p510 = pneg %p191
        $region74: #{tpu_custom_call.1} parent=55 // pred_check_branch
          %512 = sbr.rel (%p510) target = $region76
        $region75: #{tpu_custom_call.1} parent=55 // pred_region
          %514 = dma.done [#allocation9], 256
        $region76: #{tpu_custom_call.1} parent=55 // pred_fallthru
          _
        // Predicated region
        $region77: #{tpu_custom_call.1} parent=55 // pred_check
          %p515 = pneg %p233
        $region78: #{tpu_custom_call.1} parent=55 // pred_check_branch
          %517 = sbr.rel (%p515) target = $region80
        $region79: #{tpu_custom_call.1} parent=55 // pred_region
          %519 = dma.done [#allocation12], 256
        $region80: #{tpu_custom_call.1} parent=55 // pred_fallthru
          _
        %s520 = sand.u32 %s59, 1
        %s521 = scalar_lea.sflag [#allocation3], %s520
        %s522 = sand.u32 %s59, 1
        %s523 = smul.addr %s522, 8
        %s524 = scalar_lea.vmem [#allocation2], %s523
        %p525 = pneg %p72
        %p526 = pneg %p69
        %s527 = sand.u32 %s37, 1
        %s528 = scalar_lea.sflag [#allocation6], %s527
        %s529 = sand.u32 %s87, 1
        %s530 = smul.addr %s529, 8
        %s531 = scalar_lea.vmem [#allocation5], %s530
        %p532 = pneg %p100
        %p533 = pneg %p97
        %s534 = sand.u32 %s37, 1
        %s535 = scalar_lea.sflag [#allocation6], %s534
        %s536 = sand.u32 %s115, 1
        %s537 = smul.addr %s536, 8
        %s538 = scalar_lea.vmem [#allocation7], %s537
        %p539 = pneg %p128
        %p540 = pneg %p125
        %p541 = pneg %p149
        %p542 = pneg %p146
        %p543 = pneg %p170
        %p544 = pneg %p167
        %p545 = pneg %p191
        %p546 = pneg %p188
        %p547 = pneg %p212
        %p548 = pneg %p209
        %p549 = pneg %p233
        %p550 = pneg %p230
        %p551 = pneg %p254
        %p552 = pneg %p251
        %p553 = pneg %p282
        %p554 = pneg %p279
        %s555 = sand.u32 %s269, 1
        %s556 = scalar_lea.sflag [#allocation4], %s555
        %s557 = sand.u32 %s269, 1
        %s558 = smul.addr %s557, 16
        %s559 = scalar_lea.vmem [#allocation13], %s558
        %p560 = pneg %p310
        %p561 = pneg %p307
        %s562 = sand.u32 %s37, 1
        %s563 = scalar_lea.sflag [#allocation15], %s562
        %s564 = sand.u32 %s297, 1
        %s565 = smul.addr %s564, 16
        %s566 = scalar_lea.vmem [#allocation14], %s565
        %p567 = pneg %p338
        %p568 = pneg %p335
        %s569 = sand.u32 %s37, 1
        %s570 = scalar_lea.sflag [#allocation15], %s569
        %s571 = sand.u32 %s325, 1
        %s572 = smul.addr %s571, 16
        %s573 = scalar_lea.vmem [#allocation16], %s572
        %v575 = vld [vmem:[%s479] sm:$0xff]
        %v576 = vpack.c.bf16 %v575, %v575
        %v577 = vld [vmem:[#allocation8] sm:$0xf]
        %v578 = vld [vmem:[#allocation8 + $0x4] sm:$0xf]
        %v579 = vld [vmem:[#allocation8 + $0x8] sm:$0xf]
        %v580 = vld [vmem:[#allocation8 + $0xc] sm:$0xf]
        %v581 = vld [vmem:[%s4] sm:$0x1]
        %v583 = vperm.slane %v581, 0
        %v589 = vunpack.c.l.b16 %v577
        %v590 = vunpack.c.l.b16 %v578
        %v591 = vunpack.c.l.b16 %v579
        %v592 = vunpack.c.l.b16 %v580
        %v593 = vpack.c.b16 %v590, %v589
        %v594 = vpack.c.b16 %v592, %v591
        %vm597 = vcmask 261120
        %v599 = vsel %vm597, %v576, 0
        %601 = vmatpush.bf16.msra.mxu0 0
        %602 = vmatpush.bf16.msra.mxu0 0
        %603 = vmatpush.bf16.msra.mxu0 0
        %604 = vmatpush.bf16.msra.mxu0 0
        %605 = vmatpush.bf16.msra.mxu0 0
        %606 = vmatpush.bf16.msra.mxu0 0
        %607 = vmatpush.bf16.msra.mxu0 %v594
        %608 = vmatpush.bf16.msra.mxu0 %v593
        %609 = vmatmul.bf16.gmra.mxu0 %v599
        %v610 = vpop.f32.mrf.mxu0
        %v611 = vadd.f32 %v583, %v610
        %v612 = vpop.f32.mrf.mxu0
        %613 = vdwg.mxu0
        %v614 = vpack.c.bf16 %v611, %v611
        %vm615 = vcmask 60416
        %616 = vst.msk [vmem:[%s559] sm:$0xf] %vm615, %v614
        %618 = vrot.lane.b32.xlu0 %v614, 120
        %v619 = vpop.permute.xlu0 %618
        %s621 = scalar_lea.vmem %s559, 4 [#allocation13]
        %622 = vst.msk [vmem:[%s621] sm:$0xf] %vm615, %v619
        %623 = vrot.lane.b32.xlu0 %v614, 112
        %v624 = vpop.permute.xlu0 %623
        %s626 = scalar_lea.vmem %s559, 8 [#allocation13]
        %627 = vst.msk [vmem:[%s626] sm:$0xf] %vm615, %v624
        %628 = vrot.lane.b32.xlu0 %v614, 104
        %v629 = vpop.permute.xlu0 %628
        %s631 = scalar_lea.vmem %s559, 12 [#allocation13]
        %632 = vst.msk [vmem:[%s631] sm:$0xf] %vm615, %v629
        %v633 = vld [vmem:[%s489] sm:$0xff]
        %v634 = vpack.c.bf16 %v633, %v633
        %v635 = vld [vmem:[#allocation10] sm:$0xf]
        %v636 = vld [vmem:[#allocation10 + $0x4] sm:$0xf]
        %v637 = vld [vmem:[#allocation10 + $0x8] sm:$0xf]
        %v638 = vld [vmem:[#allocation10 + $0xc] sm:$0xf]
        %v639 = vld [vmem:[%s6] sm:$0x1]
        %v641 = vperm.slane %v639, 0
        %v647 = vunpack.c.l.b16 %v635
        %v648 = vunpack.c.l.b16 %v636
        %v649 = vunpack.c.l.b16 %v637
        %v650 = vunpack.c.l.b16 %v638
        %v651 = vpack.c.b16 %v648, %v647
        %v652 = vpack.c.b16 %v650, %v649
        %v656 = vsel %vm597, %v634, 0
        %658 = vmatpush.bf16.msra.mxu0 0
        %659 = vmatpush.bf16.msra.mxu0 0
        %660 = vmatpush.bf16.msra.mxu0 0
        %661 = vmatpush.bf16.msra.mxu0 0
        %662 = vmatpush.bf16.msra.mxu0 0
        %663 = vmatpush.bf16.msra.mxu0 0
        %664 = vmatpush.bf16.msra.mxu0 %v652
        %665 = vmatpush.bf16.msra.mxu0 %v651
        %666 = vmatmul.bf16.gmra.mxu0 %v656
        %v667 = vpop.f32.mrf.mxu0
        %v668 = vadd.f32 %v641, %v667
        %v669 = vpop.f32.mrf.mxu0
        %670 = vdwg.mxu0
        %v671 = vpack.c.bf16 %v668, %v668
        %672 = vst.msk [vmem:[%s566] sm:$0xf] %vm615, %v671
        %674 = vrot.lane.b32.xlu0 %v671, 120
        %v675 = vpop.permute.xlu0 %674
        %s677 = scalar_lea.vmem %s566, 4 [#allocation14]
        %678 = vst.msk [vmem:[%s677] sm:$0xf] %vm615, %v675
        %679 = vrot.lane.b32.xlu0 %v671, 112
        %v680 = vpop.permute.xlu0 %679
        %s682 = scalar_lea.vmem %s566, 8 [#allocation14]
        %683 = vst.msk [vmem:[%s682] sm:$0xf] %vm615, %v680
        %684 = vrot.lane.b32.xlu0 %v671, 104
        %v685 = vpop.permute.xlu0 %684
        %s687 = scalar_lea.vmem %s566, 12 [#allocation14]
        %688 = vst.msk [vmem:[%s687] sm:$0xf] %vm615, %v685
        %v689 = vld [vmem:[%s499] sm:$0xff]
        %v690 = vpack.c.bf16 %v689, %v689
        %v691 = vld [vmem:[#allocation11] sm:$0xf]
        %v692 = vld [vmem:[#allocation11 + $0x4] sm:$0xf]
        %v693 = vld [vmem:[#allocation11 + $0x8] sm:$0xf]
        %v694 = vld [vmem:[#allocation11 + $0xc] sm:$0xf]
        %v695 = vld [vmem:[%s8] sm:$0x1]
        %v697 = vperm.slane %v695, 0
        %v703 = vunpack.c.l.b16 %v691
        %v704 = vunpack.c.l.b16 %v692
        %v705 = vunpack.c.l.b16 %v693
        %v706 = vunpack.c.l.b16 %v694
        %v707 = vpack.c.b16 %v704, %v703
        %v708 = vpack.c.b16 %v706, %v705
        %v712 = vsel %vm597, %v690, 0
        %714 = vmatpush.bf16.msra.mxu0 0
        %715 = vmatpush.bf16.msra.mxu0 0
        %716 = vmatpush.bf16.msra.mxu0 0
        %717 = vmatpush.bf16.msra.mxu0 0
        %718 = vmatpush.bf16.msra.mxu0 0
        %719 = vmatpush.bf16.msra.mxu0 0
        %720 = vmatpush.bf16.msra.mxu0 %v708
        %721 = vmatpush.bf16.msra.mxu0 %v707
        %722 = vmatmul.bf16.gmra.mxu0 %v712
        %v723 = vpop.f32.mrf.mxu0
        %v724 = vadd.f32 %v697, %v723
        %v725 = vpop.f32.mrf.mxu0
        %726 = vdwg.mxu0
        %v727 = vpack.c.bf16 %v724, %v724
        %728 = vst.msk [vmem:[%s573] sm:$0xf] %vm615, %v727
        %730 = vrot.lane.b32.xlu0 %v727, 120
        %v731 = vpop.permute.xlu0 %730
        %s733 = scalar_lea.vmem %s573, 4 [#allocation16]
        %734 = vst.msk [vmem:[%s733] sm:$0xf] %vm615, %v731
        %735 = vrot.lane.b32.xlu0 %v727, 112
        %v736 = vpop.permute.xlu0 %735
        %s738 = scalar_lea.vmem %s573, 8 [#allocation16]
        %739 = vst.msk [vmem:[%s738] sm:$0xf] %vm615, %v736
        %740 = vrot.lane.b32.xlu0 %v727, 104
        %v741 = vpop.permute.xlu0 %740
        %s743 = scalar_lea.vmem %s573, 12 [#allocation16]
        %744 = vst.msk [vmem:[%s743] sm:$0xf] %vm615, %v741
        %s745 = sand.u32 %s269, 1
        %s746 = scalar_lea.sflag [#allocation4], %s745
        %s747 = sand.u32 %s269, 1
        %s748 = smul.addr %s747, 16
        %s749 = scalar_lea.vmem [#allocation13], %s748
        %s750 = sand.u32 %s37, 1
        %s751 = scalar_lea.sflag [#allocation15], %s750
        %s752 = sand.u32 %s297, 1
        %s753 = smul.addr %s752, 16
        %s754 = scalar_lea.vmem [#allocation14], %s753
        %s755 = sand.u32 %s37, 1
        %s756 = scalar_lea.sflag [#allocation15], %s755
        %s757 = sand.u32 %s325, 1
        %s758 = smul.addr %s757, 16
        %s759 = scalar_lea.vmem [#allocation16], %s758
        // Predicated region
        $region81: #{tpu_custom_call.1} parent=55 // pred_check
          %p760 = pneg %p279
        $region82: #{tpu_custom_call.1} parent=55 // pred_check_branch
          %762 = sbr.rel (%p760) target = $region84
        $region83: #{tpu_custom_call.1} parent=55 // pred_region
          %764 = vsyncadd %s746, 0
          %s765 = smul.addr %s41, 4
          %s766 = sadd.s32 %s42, %s765
          %s767 = smul.addr %s766, 4
          %s768 = scalar_lea.hbm %s9, %s767
          %s769 = sshll.u32 %s749, 4
          %s770 = int_to_ptr.vmem [resolvable:$true] %s769
          %s771 = sshll.u32 %s768, 4
          %s772 = int_to_ptr.hbm [resolvable:$true] %s771
          %777 = dma.vmem_to_hbm [thread:$0]  %s770, 256, %s772, %s746, 64, 64, 4
        $region84: #{tpu_custom_call.1} parent=55 // pred_fallthru
          _
        // Predicated region
        $region85: #{tpu_custom_call.1} parent=55 // pred_check
          %p778 = pneg %p307
        $region86: #{tpu_custom_call.1} parent=55 // pred_check_branch
          %780 = sbr.rel (%p778) target = $region88
        $region87: #{tpu_custom_call.1} parent=55 // pred_region
          %782 = vsyncadd %s751, 0
          %s783 = smul.addr %s41, 4
          %s784 = sadd.s32 %s42, %s783
          %s785 = smul.addr %s784, 4
          %s786 = scalar_lea.hbm %s10, %s785
          %s787 = sshll.u32 %s754, 4
          %s788 = int_to_ptr.vmem [resolvable:$true] %s787
          %s789 = sshll.u32 %s786, 4
          %s790 = int_to_ptr.hbm [resolvable:$true] %s789
          %795 = dma.vmem_to_hbm [thread:$0]  %s788, 256, %s790, %s751, 64, 64, 4
        $region88: #{tpu_custom_call.1} parent=55 // pred_fallthru
          _
        // Predicated region
        $region89: #{tpu_custom_call.1} parent=55 // pred_check
          %p796 = pneg %p335
        $region90: #{tpu_custom_call.1} parent=55 // pred_check_branch
          %798 = sbr.rel (%p796) target = $region92
        $region91: #{tpu_custom_call.1} parent=55 // pred_region
          %800 = vsyncadd %s756, 0
          %s801 = smul.addr %s41, 4
          %s802 = sadd.s32 %s42, %s801
          %s803 = smul.addr %s802, 4
          %s804 = scalar_lea.hbm %s11, %s803
          %s805 = sshll.u32 %s759, 4
          %s806 = int_to_ptr.vmem [resolvable:$true] %s805
          %s807 = sshll.u32 %s804, 4
          %s808 = int_to_ptr.hbm [resolvable:$true] %s807
          %813 = dma.vmem_to_hbm [thread:$0]  %s806, 256, %s808, %s756, 64, 64, 4
        $region92: #{tpu_custom_call.1} parent=55 // pred_fallthru
          _
      $region56: #{tpu_custom_call.1} parent=5 // pred_fallthru
        _
      %p814 = scmp.le.s32.totalorder 2, %s32
      // Predicated region
      $region93: #{tpu_custom_call.1} parent=5 // pred_check
        %p815 = pneg %p814
      $region94: #{tpu_custom_call.1} parent=5 // pred_check_branch
        %817 = sbr.rel (%p815) target = $region96
      $region95: #{tpu_custom_call.1} parent=5 // pred_region
        %s818 = ssub.s32 %s32, 2
        // Predicated region
        $region97: #{tpu_custom_call.1} parent=95 // pred_check
          %p819 = pneg %p285
        $region98: #{tpu_custom_call.1} parent=95 // pred_check_branch
          %821 = sbr.rel (%p819) target = $region100
        $region99: #{tpu_custom_call.1} parent=95 // pred_region
          %s822 = sand.u32 %s270, 1
          %s823 = scalar_lea.sflag [#allocation4], %s822
          %s824 = sand.u32 %s270, 1
          %s825 = smul.addr %s824, 16
          %s826 = scalar_lea.vmem [#allocation13], %s825
          %828 = dma.done %s823, 256
        $region100: #{tpu_custom_call.1} parent=95 // pred_fallthru
          _
        // Predicated region
        $region101: #{tpu_custom_call.1} parent=95 // pred_check
          %p829 = pneg %p313
        $region102: #{tpu_custom_call.1} parent=95 // pred_check_branch
          %831 = sbr.rel (%p829) target = $region104
        $region103: #{tpu_custom_call.1} parent=95 // pred_region
          %s832 = sand.u32 %s38, 1
          %s833 = scalar_lea.sflag [#allocation15], %s832
          %s834 = sand.u32 %s298, 1
          %s835 = smul.addr %s834, 16
          %s836 = scalar_lea.vmem [#allocation14], %s835
          %838 = dma.done %s833, 256
        $region104: #{tpu_custom_call.1} parent=95 // pred_fallthru
          _
        // Predicated region
        $region105: #{tpu_custom_call.1} parent=95 // pred_check
          %p839 = pneg %p341
        $region106: #{tpu_custom_call.1} parent=95 // pred_check_branch
          %841 = sbr.rel (%p839) target = $region108
        $region107: #{tpu_custom_call.1} parent=95 // pred_region
          %s842 = sand.u32 %s38, 1
          %s843 = scalar_lea.sflag [#allocation15], %s842
          %s844 = sand.u32 %s326, 1
          %s845 = smul.addr %s844, 16
          %s846 = scalar_lea.vmem [#allocation16], %s845
          %848 = dma.done %s843, 256
        $region108: #{tpu_custom_call.1} parent=95 // pred_fallthru
          _
      $region96: #{tpu_custom_call.1} parent=5 // pred_fallthru
        _
    $region6: #{tpu_custom_call.1} parent=1 // loop_footer
      %s36 = sadd.s32 1, %s32
    $region7: #{tpu_custom_call.1} parent=1 // loop_footer_branch
      %31 = sbr.rel target = $region3
    $region8: #{tpu_custom_call.1} parent=1 // loop_exit
      _
    %849 = vsyncpa [#allocation3], 1
    %s850 = scalar_lea.sflag [#allocation3], 1
    %851 = vsyncpa %s850, 1
    %852 = vsyncpa [#allocation6], 1
    %s853 = scalar_lea.sflag [#allocation6], 1
    %854 = vsyncpa %s853, 1
    %855 = vsyncpa [#allocation9], 1
    %856 = vsyncpa [#allocation12], 1
    %857 = vsyncpa [#allocation4], 1
    %s858 = scalar_lea.sflag [#allocation4], 1
    %859 = vsyncpa %s858, 1
    %860 = vsyncpa [#allocation15], 1
    %s861 = scalar_lea.sflag [#allocation15], 1
    %862 = vsyncpa %s861, 1

</llo_original>
